<compile_context>
chip_gen: v6e
topology: v6e:2x2x1
jax: 0.10.0
libtpu: 0.0.40
codegen_flags: <defaults>
</compile_context>

<pallas_src>
import math

import jax
import jax.numpy as jnp
import numpy as np
from jax.experimental import pallas as pl
from jax.experimental.pallas import tpu as pltpu


# ---------------------------------------------------------------------------
# kernel
# ---------------------------------------------------------------------------
def _pos_emb_kernel(const_ref, o_ref):
    """One row-tile of the packed sinusoidal table.

    const_ref: (2, W) f32.  Row 0 = k * div  (per packed column),
               Row 1 = lane_pos * div + phase  (per packed column).
    o_ref:     (blk_rows, W) f32 output tile.
    """
    blk_rows, w = o_ref.shape
    sdiv = const_ref[0:1, :]                                   # (1, W)
    # Fold the tile's absolute row offset into a (1, W) base row (cheap).
    row0 = (pl.program_id(0) * blk_rows).astype(jnp.float32)
    base = const_ref[1:2, :] + row0 * sdiv                     # (1, W)
    # Per-element body: iota -> f32 -> mul -> add -> sin (cos == sin(x+pi/2)).
    r = jax.lax.broadcasted_iota(jnp.int32, (blk_rows, w), 0).astype(jnp.float32)
    o_ref[...] = jnp.sin(r * sdiv + base)


# ---------------------------------------------------------------------------
# tiling helpers
# ---------------------------------------------------------------------------
def _round_up(a: int, b: int) -> int:
    return ((a + b - 1) // b) * b


def _packing_factor(d_model: int) -> int:
    """Positions packed per output row so the row width is a multiple of 128."""
    if d_model < 128 and d_model % 2 == 0:
        k = 128 // math.gcd(d_model, 128)
        w = k * d_model
        if w <= 2048:
            # widen to ~512 lanes for longer contiguous stores
            k *= max(1, 512 // w)
            return k
    return 1


def _vmem_budget() -> tuple[int, int]:
    """(per-output-tile byte cap, vmem_limit_bytes) sized per TPU generation."""
    try:
        vmem = getattr(pltpu.get_tpu_info(), "vmem_capacity_bytes", 64 << 20)
    except Exception:
        vmem = 64 << 20
    if vmem >= (96 << 20):            # v5e / v6e: 128 MiB physical VMEM
        return 16 << 20, 64 << 20
    return 10 << 20, 48 << 20         # v7x: 64 MiB physical VMEM


def _choose_blk_rows(n_rows: int, row_bytes: int, tile_cap: int) -> int:
    """Row-tile size: large (amortize ~0.35us/step), multiple of 8, VMEM-capped,
    and even / near-equal block counts when >= 2 blocks fit (v7x dual-TC)."""
    if n_rows <= 8:
        return n_rows                              # full-dim block, always legal
    cap_rows = max(8, tile_cap // row_bytes)
    blk = max(8, (min(n_rows, cap_rows) // 8) * 8)
    if n_rows >= 16:
        nblk = pl.cdiv(n_rows, blk)
        if nblk < 2:
            nblk = 2
        if nblk % 2:
            nblk += 1
        blk = max(8, _round_up(pl.cdiv(n_rows, nblk), 8))
    return blk


# ---------------------------------------------------------------------------
# table builder + cache
# ---------------------------------------------------------------------------
def _build_pe(seq_len: int, d_model: int) -> jax.Array:
    k = _packing_factor(d_model)
    w = k * d_model
    s_pad = _round_up(seq_len, k)
    n_rows = s_pad // k

    # Per original column j: div[j] = exp(2*(j//2) * -ln(10000)/d_model),
    # phase[j] = pi/2 for odd j else 0.  Tile to the packed width and fold the
    # per-lane position offset (col // d_model) into the base row.
    j = np.arange(d_model)
    div = np.exp((2 * (j // 2)).astype(np.float64) * (-math.log(10000.0) / d_model))
    phase = np.where(j % 2 == 1, math.pi / 2.0, 0.0)
    c = np.arange(w)
    div_c = div[c % d_model]
    const = np.stack(
        [np.float64(k) * div_c,
         (c // d_model).astype(np.float64) * div_c + phase[c % d_model]]
    ).astype(np.float32)                                        # (2, W)

    tile_cap, vmem_limit = _vmem_budget()
    blk = _choose_blk_rows(n_rows, w * 4, tile_cap)
    grid = (pl.cdiv(n_rows, blk),)

    pe_packed = pl.pallas_call(
        _pos_emb_kernel,
        out_shape=jax.ShapeDtypeStruct((n_rows, w), jnp.float32),
        grid_spec=pltpu.PrefetchScalarGridSpec(
            num_scalar_prefetch=0,
            grid=grid,
            in_specs=[pl.BlockSpec((2, w), lambda r: (0, 0))],
            out_specs=pl.BlockSpec((blk, w), lambda r: (r, 0)),
        ),
        compiler_params=pltpu.CompilerParams(
            dimension_semantics=("parallel",),
            vmem_limit_bytes=vmem_limit,
        ),
    )(jnp.asarray(const))

    # Row-major (n_rows, k*D) -> (s_pad, D) is a metadata-only reshape.
    pe = pe_packed.reshape(s_pad, d_model)[:seq_len]
    return pe[None, :, :]                                       # (1, S, D)


_PE_CACHE: dict[tuple[int, int], jax.Array] = {}


def positional_embedding(x: jax.Array, d_model: int) -> jax.Array:
    """Equivalent of PositionalEmbedding(d_model)(x): returns pe[:, :x.shape[1]].

    The table only depends on (seq_len, d_model), so it is built once per shape
    and cached (the PyTorch module likewise builds it once in __init__).
    """
    key = (int(x.shape[1]), int(d_model))
    pe = _PE_CACHE.get(key)
    if pe is None:
        pe = _build_pe(*key)
        _PE_CACHE[key] = pe
    return pe


# ---------------------------------------------------------------------------
# reference + test
# ---------------------------------------------------------------------------
def _reference(seq_len: int, d_model: int) -> np.ndarray:
    """NumPy port of the PyTorch __init__ table (sliced to seq_len)."""
    pe = np.zeros((seq_len, d_model), dtype=np.float32)
    position = np.arange(0, seq_len, dtype=np.float32)[:, None]
    div_term = np.exp(np.arange(0, d_model, 2, dtype=np.float32)
                      * -(math.log(10000.0) / d_model))
    pe[:, 0::2] = np.sin(position * div_term)
    pe[:, 1::2] = np.cos(position * div_term)
    return pe[None]


if __name__ == "__main__":
    # Small shapes consistent with the module: batch=2, seq=8, d_model=32.
    B, S, D = 2, 8, 32
    key = jax.random.PRNGKey(0)
    x = jax.random.normal(key, (B, S, D), dtype=jnp.float32)

    out = positional_embedding(x, d_model=D)
    out = jax.block_until_ready(out)
    assert out.shape == (1, S, D), out.shape
    np.testing.assert_allclose(np.asarray(out), _reference(S, D),
                               atol=1e-5, rtol=1e-5)

    # Cache hit: second call must not rebuild.
    out2 = positional_embedding(x, d_model=D)
    assert out2 is out

    # A larger shape exercising multi-block grid + packed layout (looser tol:
    # cos computed as sin(x + pi/2), see accuracy note at top of file).
    S2, D2 = 200, 96
    x2 = jax.random.normal(key, (1, S2, D2), dtype=jnp.float32)
    out3 = jax.block_until_ready(positional_embedding(x2, d_model=D2))
    assert out3.shape == (1, S2, D2), out3.shape
    np.testing.assert_allclose(np.asarray(out3), _reference(S2, D2),
                               atol=1e-4, rtol=1e-4)

    print("KERNEL_OK")
</pallas_src>

<mosaic_0001>
module attributes {stable_mosaic.version = 11 : i64} {
  func.func @_pos_emb_kernel(%arg0: i32, %arg1: memref<2x512xf32, #tpu.memory_space<vmem>>, %arg2: memref<1x512xf32, #tpu.memory_space<vmem>>) attributes {dimension_semantics = [#tpu.dimension_semantics<parallel>], iteration_bounds = array<i64: 1>, scalar_prefetch = 0 : i64, scratch_operands = 0 : i64, tpu.core_type = #tpu.core_type<tc>, window_params = [{pipeline_mode = #tpu.pipeline_mode<synchronous>, transform_indices = @transform_0, window_bounds = array<i64: 2, 512>}, {transform_indices = @transform_1, window_bounds = array<i64: 1, 512>}]} {
    %c0 = arith.constant 0 : index
    %c0_0 = arith.constant 0 : index
    %0 = vector.load %arg1[%c0, %c0_0] : memref<2x512xf32, #tpu.memory_space<vmem>>, vector<1x512xf32>
    %c1_i32 = arith.constant 1 : i32
    %1 = arith.muli %arg0, %c1_i32 : i32
    %2 = arith.sitofp %1 : i32 to f32
    %c1 = arith.constant 1 : index
    %c0_1 = arith.constant 0 : index
    %3 = vector.load %arg1[%c1, %c0_1] : memref<2x512xf32, #tpu.memory_space<vmem>>, vector<1x512xf32>
    %4 = vector.broadcast %2 : f32 to vector<1x512xf32>
    %5 = arith.mulf %4, %0 : vector<1x512xf32>
    %6 = arith.addf %3, %5 : vector<1x512xf32>
    %7 = tpu.iota {dimensions = array<i32: 0>} : vector<1x512xi32>
    %8 = arith.sitofp %7 : vector<1x512xi32> to vector<1x512xf32>
    %9 = arith.mulf %8, %0 : vector<1x512xf32>
    %10 = arith.addf %9, %6 : vector<1x512xf32>
    %11 = math.sin %10 : vector<1x512xf32>
    %c0_2 = arith.constant 0 : index
    %c0_3 = arith.constant 0 : index
    %12 = vector.load %arg2[%c0_2, %c0_3] : memref<1x512xf32, #tpu.memory_space<vmem>>, vector<1x512xf32>
    tpu.vector_store %arg2[%c0_2, %c0_3], %11 {strides = array<i32>} : memref<1x512xf32, #tpu.memory_space<vmem>>, vector<1x512xf32>,
    return
  }
  func.func @transform_0(%arg0: i32) -> (i32, i32) {
    %c0_i32 = arith.constant 0 : i32
    %c0_i32_0 = arith.constant 0 : i32
    %c0_i32_1 = arith.constant 0 : i32
    return %c0_i32, %c0_i32_0 : i32, i32
  }
  func.func @transform_1(%arg0: i32) -> (i32, i32) {
    %c0_i32 = arith.constant 0 : i32
    %c0_i32_0 = arith.constant 0 : i32
    return %arg0, %c0_i32 : i32, i32
  }
}

</mosaic_0001>

<llo_original>
// kernel: tpu_custom_call.1
$region0: #{tpu_custom_call.1}
  #allocation0 [shape = 'u32[]', space=smem, size = 0x4, offset = 0x4, fixed_abs, tag = 'smem constant byte address 0x4 - core index']
  #allocation1 [shape = 'u32[144,128]{1,0:T(1,128)}', space=vmem, size = 0x12000, scoped, tag = 'internal scratch']
  %s0 = inlined_call_operand.hbm [shape: f32[2,512], index: 0, kind: input, shape index: {}]
  %s1 = inlined_call_operand.hbm [shape: f32[1,512], index: 1, kind: output, shape index: {}]
  %s2 = sld [smem:[#allocation0]]
  $region18: #{tpu_custom_call.1} parent=0
    _
  %s4 = ssub.s32 1, %s2
  %s5 = scalar_select 0, %s4, %s2
  $region1: #{tpu_custom_call.1} parent=0
    #allocation2 [shape = 'u8[4096]{0}', space=vmem, size = 0x1000, scoped, tag = 'input window, operand 0, single buffered']
    #allocation3 [shape = 's32[1]{0}', space=sflag, size = 0x4, scoped, tag = 'scoped memory for tpu_custom_call.1']
    #allocation4 [shape = 's32[1]{0}', space=sflag, size = 0x4, scoped, tag = 'scoped memory for tpu_custom_call.1']
    #allocation5 [shape = 'u8[2048]{0}', space=vmem, size = 0x800, scoped, tag = 'output window, operand 0, single buffered']
    %6 = vsyncpa [#allocation3], 0
    %7 = vsyncpa [#allocation4], 0
    // Predicated region
    $region2: #{tpu_custom_call.1} parent=1 // pred_check
      _
    $region3: #{tpu_custom_call.1} parent=1 // pred_check_branch
      %9 = sbr.rel (0) target = $region5
    $region4: #{tpu_custom_call.1} parent=1 // pred_region
      %s11 = ssub.s32 128, 128
      %12 = vsyncadd [#allocation3], %s11
      %s14 = sshll.u32 [#allocation2], 4
      %s15 = int_to_ptr.vmem [resolvable:$true] %s14
      %17 = dma.hbm_to_vmem [thread:$0]  %s0, 128, %s15, [#allocation3]
    $region5: #{tpu_custom_call.1} parent=1 // pred_fallthru
      _
    // Predicated region
    $region6: #{tpu_custom_call.1} parent=1 // pred_check
      _
    $region7: #{tpu_custom_call.1} parent=1 // pred_check_branch
      %19 = sbr.rel (0) target = $region9
    $region8: #{tpu_custom_call.1} parent=1 // pred_region
      %20 = dma.done [#allocation3], 128
    $region9: #{tpu_custom_call.1} parent=1 // pred_fallthru
      _
    %v21 = vld [vmem:[#allocation2] ss:$2 sm:$0xf]
    %s22 = scvt.s32.f32 0
    %s23 = scalar_lea.vmem [#allocation2], 1
    %v24 = vld [vmem:[%s23] ss:$2 sm:$0xf]
    %v25 = vstv %s22
    %v26 = vmul.f32 %v25, %v21
    %v27 = vadd.f32 %v24, %v26
    %v28 = vlaneseq
    %v29 = vshrl.u32 %v28, 7
    %v30 = vcvt.s32.f32 %v29
    %v32 = vlaneseq
    %v33 = vshrl.u32 %v32, 7
    %v34 = vsub.s32 0, %v33
    %v35 = vrot.slane %v21, %v34
    %v36 = vlaneseq
    %v37 = vshrl.u32 %v36, 7
    %v38 = vsub.s32 1, %v37
    %v39 = vrot.slane %v21, %v38
    %v40 = vlaneseq
    %v41 = vshrl.u32 %v40, 7
    %v42 = vsub.s32 2, %v41
    %v43 = vrot.slane %v21, %v42
    %v44 = vlaneseq
    %v45 = vshrl.u32 %v44, 7
    %v46 = vsub.s32 3, %v45
    %v47 = vrot.slane %v21, %v46
    %v52 = vmul.f32 %v30, %v35
    %v53 = vmul.f32 %v30, %v39
    %v54 = vmul.f32 %v30, %v43
    %v55 = vmul.f32 %v30, %v47
    %v57 = vlaneseq
    %v58 = vshrl.u32 %v57, 7
    %v59 = vsub.s32 0, %v58
    %v60 = vrot.slane %v27, %v59
    %v61 = vlaneseq
    %v62 = vshrl.u32 %v61, 7
    %v63 = vsub.s32 1, %v62
    %v64 = vrot.slane %v27, %v63
    %v65 = vlaneseq
    %v66 = vshrl.u32 %v65, 7
    %v67 = vsub.s32 2, %v66
    %v68 = vrot.slane %v27, %v67
    %v69 = vlaneseq
    %v70 = vshrl.u32 %v69, 7
    %v71 = vsub.s32 3, %v70
    %v72 = vrot.slane %v27, %v71
    %v77 = vadd.f32 %v52, %v60
    %v78 = vadd.f32 %v53, %v64
    %v79 = vadd.f32 %v54, %v68
    %v80 = vadd.f32 %v55, %v72
    %v81 = vand.u32 2147483647, %v77
    %vm82 = vcmp.le.f32.partialorder %v81, 0.7853982
    %vm83 = vcmp.lt.s32.totalorder %v77, 0
    %v84 = vand.u32 %v77, 2139095040
    %v85 = vshrl.u32 %v84, 23
    %v86 = vsub.s32 %v85, 127
    %v87 = vand.u32 2147483647, %v77
    %v88 = vand.u32 %v87, 8388607
    %v89 = vor.u32 %v88, 8388608
    %v90 = vsub.s32 0, %v89
    %v91 = vadd.s32 %v86, 1
    %vm92 = vcmp.gt.s32.totalorder %v91, 0
    %v93 = vsel %vm92, %v91, 0
    %v94 = vshrl.u32 %v93, 5
    %v95 = vand.u32 %v93, 31
    %v96 = vsub.s32 32, %v95
    %v97 = vshrl.u32 683565275, %v96
    %v98 = vshll.u32 683565275, %v95
    %v99 = vshrl.u32 2475754826, %v96
    %v100 = vor.u32 %v98, %v99
    %v101 = vshll.u32 2475754826, %v95
    %v102 = vshrl.u32 2131351028, %v96
    %v103 = vor.u32 %v101, %v102
    %v104 = vshll.u32 2131351028, %v95
    %v105 = vshrl.u32 2102212464, %v96
    %v106 = vor.u32 %v104, %v105
    %v107 = vshll.u32 2102212464, %v95
    %v108 = vshrl.u32 920167782, %v96
    %v109 = vor.u32 %v107, %v108
    %v110 = vshll.u32 920167782, %v95
    %v111 = vshrl.u32 1326507024, %v96
    %v112 = vor.u32 %v110, %v111
    %vm113 = vcmp.lt.s32.totalorder %v94, 1
    %vm114 = vcmp.lt.s32.totalorder %v94, 2
    %vm115 = vcmp.lt.s32.totalorder %v94, 3
    %vm116 = vcmp.lt.s32.totalorder %v94, 4
    %v117 = vsel %vm113, %v97, %v100
    %v118 = vsel %vm116, %v106, 2102212464
    %v119 = vsel %vm115, %v103, %v118
    %v120 = vsel %vm114, %v117, %v119
    %v121 = vsel %vm113, %v100, %v103
    %v122 = vsel %vm116, %v109, 920167782
    %v123 = vsel %vm115, %v106, %v122
    %v124 = vsel %vm114, %v121, %v123
    %v125 = vsel %vm113, %v103, %v106
    %v126 = vsel %vm116, %v112, 1326507024
    %v127 = vsel %vm115, %v109, %v126
    %v128 = vsel %vm114, %v125, %v127
    %v129 = vshll.u32 %v89, 8
    %v130 = vmul.u32.u64.compose %v129, %v128
    %v131 = vextract.low.u32 %v130
    %v132 = vextract.high.u32 %v130
    %v133 = vmul.u32.u64.compose %v129, %v124
    %v134 = vextract.low.u32 %v133
    %v135 = vextract.high.u32 %v133
    %v136 = vmul.u32 %v129, %v120
    %v137 = vadd.s32 %v132, %v134
    %vm138 = vc.u32 %v132, %v134
    %v139 = vadd.s32 %v135, 1
    %v140 = vsel %vm138, %v139, %v135
    %v141 = vadd.s32 %v136, %v140
    %v142 = vadd.s32 %v141, 536870912
    %v143 = vshrl.u32 %v142, 30
    %v144 = vshll.u32 %v143, 30
    %v145 = vsub.s32 %v141, %v144
    %vm146 = vcmp.lt.s32.totalorder %v145, 0
    %v147 = vsub.s32 0, %v145
    %v148 = vsel %vm146, %v147, %v145
    %v149 = vclz %v148
    %v150 = vsub.s32 %v149, 2
    %vm151 = vcmp.gt.s32.totalorder 0, %v150
    %v152 = vsel %vm151, 0, %v150
    %v153 = vsub.s32 32, %v152
    %v154 = vshll.u32 %v145, %v152
    %v155 = vshrl.u32 %v137, %v153
    %v156 = vor.u32 %v154, %v155
    %v157 = vsub.s32 4294967266, %v152
    %v158 = vadd.s32 %v157, 127
    %v159 = vshll.u32 %v158, 23
    %v160 = vor.u32 4788187, %v159
    %v161 = vand.u32 2147483647, %v160
    %v163 = vcvt.s32.f32 %v156
    %v164 = vmul.f32 %v163, %v161
    %v165 = vxor.u32 %v164, 2147483648
    %v166 = vsel %vm83, %v165, %v164
    %v167 = vsub.s32 4, %v143
    %v168 = vsel %vm83, %v167, %v143
    %v169 = vsel %vm82, %v77, %v166
    %v170 = vsel %vm82, 0, %v168
    %v171 = vcosq.f32.pop %v169
    %v172 = vsinq.f32.pop %v169
    %vm173 = vweird.f32 %v77
    %v174 = vadd.s32 %v170, 3
    %v175 = vand.u32 %v174, 3
    %vm176 = vcmp.lt.s32.totalorder %v175, 2
    %vm177 = vcmp.eq.s32.totalorder %v175, 0
    %v178 = vxor.u32 %v172, 2147483648
    %v179 = vsel %vm177, %v171, %v178
    %vm180 = vcmp.eq.s32.totalorder %v175, 2
    %v181 = vxor.u32 %v171, 2147483648
    %v182 = vsel %vm180, %v181, %v172
    %v183 = vsel %vm176, %v179, %v182
    %v184 = vsel %vm173, nan, %v183
    %v185 = vand.u32 2147483647, %v78
    %vm186 = vcmp.le.f32.partialorder %v185, 0.7853982
    %vm187 = vcmp.lt.s32.totalorder %v78, 0
    %v188 = vand.u32 %v78, 2139095040
    %v189 = vshrl.u32 %v188, 23
    %v190 = vsub.s32 %v189, 127
    %v191 = vand.u32 2147483647, %v78
    %v192 = vand.u32 %v191, 8388607
    %v193 = vor.u32 %v192, 8388608
    %v194 = vsub.s32 0, %v193
    %v195 = vadd.s32 %v190, 1
    %vm196 = vcmp.gt.s32.totalorder %v195, 0
    %v197 = vsel %vm196, %v195, 0
    %v198 = vshrl.u32 %v197, 5
    %v199 = vand.u32 %v197, 31
    %v200 = vsub.s32 32, %v199
    %v201 = vshrl.u32 683565275, %v200
    %v202 = vshll.u32 683565275, %v199
    %v203 = vshrl.u32 2475754826, %v200
    %v204 = vor.u32 %v202, %v203
    %v205 = vshll.u32 2475754826, %v199
    %v206 = vshrl.u32 2131351028, %v200
    %v207 = vor.u32 %v205, %v206
    %v208 = vshll.u32 2131351028, %v199
    %v209 = vshrl.u32 2102212464, %v200
    %v210 = vor.u32 %v208, %v209
    %v211 = vshll.u32 2102212464, %v199
    %v212 = vshrl.u32 920167782, %v200
    %v213 = vor.u32 %v211, %v212
    %v214 = vshll.u32 920167782, %v199
    %v215 = vshrl.u32 1326507024, %v200
    %v216 = vor.u32 %v214, %v215
    %vm217 = vcmp.lt.s32.totalorder %v198, 1
    %vm218 = vcmp.lt.s32.totalorder %v198, 2
    %vm219 = vcmp.lt.s32.totalorder %v198, 3
    %vm220 = vcmp.lt.s32.totalorder %v198, 4
    %v221 = vsel %vm217, %v201, %v204
    %v222 = vsel %vm220, %v210, 2102212464
    %v223 = vsel %vm219, %v207, %v222
    %v224 = vsel %vm218, %v221, %v223
    %v225 = vsel %vm217, %v204, %v207
    %v226 = vsel %vm220, %v213, 920167782
    %v227 = vsel %vm219, %v210, %v226
    %v228 = vsel %vm218, %v225, %v227
    %v229 = vsel %vm217, %v207, %v210
    %v230 = vsel %vm220, %v216, 1326507024
    %v231 = vsel %vm219, %v213, %v230
    %v232 = vsel %vm218, %v229, %v231
    %v233 = vshll.u32 %v193, 8
    %v234 = vmul.u32.u64.compose %v233, %v232
    %v235 = vextract.low.u32 %v234
    %v236 = vextract.high.u32 %v234
    %v237 = vmul.u32.u64.compose %v233, %v228
    %v238 = vextract.low.u32 %v237
    %v239 = vextract.high.u32 %v237
    %v240 = vmul.u32 %v233, %v224
    %v241 = vadd.s32 %v236, %v238
    %vm242 = vc.u32 %v236, %v238
    %v243 = vadd.s32 %v239, 1
    %v244 = vsel %vm242, %v243, %v239
    %v245 = vadd.s32 %v240, %v244
    %v246 = vadd.s32 %v245, 536870912
    %v247 = vshrl.u32 %v246, 30
    %v248 = vshll.u32 %v247, 30
    %v249 = vsub.s32 %v245, %v248
    %vm250 = vcmp.lt.s32.totalorder %v249, 0
    %v251 = vsub.s32 0, %v249
    %v252 = vsel %vm250, %v251, %v249
    %v253 = vclz %v252
    %v254 = vsub.s32 %v253, 2
    %vm255 = vcmp.gt.s32.totalorder 0, %v254
    %v256 = vsel %vm255, 0, %v254
    %v257 = vsub.s32 32, %v256
    %v258 = vshll.u32 %v249, %v256
    %v259 = vshrl.u32 %v241, %v257
    %v260 = vor.u32 %v258, %v259
    %v261 = vsub.s32 4294967266, %v256
    %v262 = vadd.s32 %v261, 127
    %v263 = vshll.u32 %v262, 23
    %v264 = vor.u32 4788187, %v263
    %v265 = vand.u32 2147483647, %v264
    %v267 = vcvt.s32.f32 %v260
    %v268 = vmul.f32 %v267, %v265
    %v269 = vxor.u32 %v268, 2147483648
    %v270 = vsel %vm187, %v269, %v268
    %v271 = vsub.s32 4, %v247
    %v272 = vsel %vm187, %v271, %v247
    %v273 = vsel %vm186, %v78, %v270
    %v274 = vsel %vm186, 0, %v272
    %v275 = vcosq.f32.pop %v273
    %v276 = vsinq.f32.pop %v273
    %vm277 = vweird.f32 %v78
    %v278 = vadd.s32 %v274, 3
    %v279 = vand.u32 %v278, 3
    %vm280 = vcmp.lt.s32.totalorder %v279, 2
    %vm281 = vcmp.eq.s32.totalorder %v279, 0
    %v282 = vxor.u32 %v276, 2147483648
    %v283 = vsel %vm281, %v275, %v282
    %vm284 = vcmp.eq.s32.totalorder %v279, 2
    %v285 = vxor.u32 %v275, 2147483648
    %v286 = vsel %vm284, %v285, %v276
    %v287 = vsel %vm280, %v283, %v286
    %v288 = vsel %vm277, nan, %v287
    %v289 = vand.u32 2147483647, %v79
    %vm290 = vcmp.le.f32.partialorder %v289, 0.7853982
    %vm291 = vcmp.lt.s32.totalorder %v79, 0
    %v292 = vand.u32 %v79, 2139095040
    %v293 = vshrl.u32 %v292, 23
    %v294 = vsub.s32 %v293, 127
    %v295 = vand.u32 2147483647, %v79
    %v296 = vand.u32 %v295, 8388607
    %v297 = vor.u32 %v296, 8388608
    %v298 = vsub.s32 0, %v297
    %v299 = vadd.s32 %v294, 1
    %vm300 = vcmp.gt.s32.totalorder %v299, 0
    %v301 = vsel %vm300, %v299, 0
    %v302 = vshrl.u32 %v301, 5
    %v303 = vand.u32 %v301, 31
    %v304 = vsub.s32 32, %v303
    %v305 = vshrl.u32 683565275, %v304
    %v306 = vshll.u32 683565275, %v303
    %v307 = vshrl.u32 2475754826, %v304
    %v308 = vor.u32 %v306, %v307
    %v309 = vshll.u32 2475754826, %v303
    %v310 = vshrl.u32 2131351028, %v304
    %v311 = vor.u32 %v309, %v310
    %v312 = vshll.u32 2131351028, %v303
    %v313 = vshrl.u32 2102212464, %v304
    %v314 = vor.u32 %v312, %v313
    %v315 = vshll.u32 2102212464, %v303
    %v316 = vshrl.u32 920167782, %v304
    %v317 = vor.u32 %v315, %v316
    %v318 = vshll.u32 920167782, %v303
    %v319 = vshrl.u32 1326507024, %v304
    %v320 = vor.u32 %v318, %v319
    %vm321 = vcmp.lt.s32.totalorder %v302, 1
    %vm322 = vcmp.lt.s32.totalorder %v302, 2
    %vm323 = vcmp.lt.s32.totalorder %v302, 3
    %vm324 = vcmp.lt.s32.totalorder %v302, 4
    %v325 = vsel %vm321, %v305, %v308
    %v326 = vsel %vm324, %v314, 2102212464
    %v327 = vsel %vm323, %v311, %v326
    %v328 = vsel %vm322, %v325, %v327
    %v329 = vsel %vm321, %v308, %v311
    %v330 = vsel %vm324, %v317, 920167782
    %v331 = vsel %vm323, %v314, %v330
    %v332 = vsel %vm322, %v329, %v331
    %v333 = vsel %vm321, %v311, %v314
    %v334 = vsel %vm324, %v320, 1326507024
    %v335 = vsel %vm323, %v317, %v334
    %v336 = vsel %vm322, %v333, %v335
    %v337 = vshll.u32 %v297, 8
    %v338 = vmul.u32.u64.compose %v337, %v336
    %v339 = vextract.low.u32 %v338
    %v340 = vextract.high.u32 %v338
    %v341 = vmul.u32.u64.compose %v337, %v332
    %v342 = vextract.low.u32 %v341
    %v343 = vextract.high.u32 %v341
    %v344 = vmul.u32 %v337, %v328
    %v345 = vadd.s32 %v340, %v342
    %vm346 = vc.u32 %v340, %v342
    %v347 = vadd.s32 %v343, 1
    %v348 = vsel %vm346, %v347, %v343
    %v349 = vadd.s32 %v344, %v348
    %v350 = vadd.s32 %v349, 536870912
    %v351 = vshrl.u32 %v350, 30
    %v352 = vshll.u32 %v351, 30
    %v353 = vsub.s32 %v349, %v352
    %vm354 = vcmp.lt.s32.totalorder %v353, 0
    %v355 = vsub.s32 0, %v353
    %v356 = vsel %vm354, %v355, %v353
    %v357 = vclz %v356
    %v358 = vsub.s32 %v357, 2
    %vm359 = vcmp.gt.s32.totalorder 0, %v358
    %v360 = vsel %vm359, 0, %v358
    %v361 = vsub.s32 32, %v360
    %v362 = vshll.u32 %v353, %v360
    %v363 = vshrl.u32 %v345, %v361
    %v364 = vor.u32 %v362, %v363
    %v365 = vsub.s32 4294967266, %v360
    %v366 = vadd.s32 %v365, 127
    %v367 = vshll.u32 %v366, 23
    %v368 = vor.u32 4788187, %v367
    %v369 = vand.u32 2147483647, %v368
    %v371 = vcvt.s32.f32 %v364
    %v372 = vmul.f32 %v371, %v369
    %v373 = vxor.u32 %v372, 2147483648
    %v374 = vsel %vm291, %v373, %v372
    %v375 = vsub.s32 4, %v351
    %v376 = vsel %vm291, %v375, %v351
    %v377 = vsel %vm290, %v79, %v374
    %v378 = vsel %vm290, 0, %v376
    %v379 = vcosq.f32.pop %v377
    %v380 = vsinq.f32.pop %v377
    %vm381 = vweird.f32 %v79
    %v382 = vadd.s32 %v378, 3
    %v383 = vand.u32 %v382, 3
    %vm384 = vcmp.lt.s32.totalorder %v383, 2
    %vm385 = vcmp.eq.s32.totalorder %v383, 0
    %v386 = vxor.u32 %v380, 2147483648
    %v387 = vsel %vm385, %v379, %v386
    %vm388 = vcmp.eq.s32.totalorder %v383, 2
    %v389 = vxor.u32 %v379, 2147483648
    %v390 = vsel %vm388, %v389, %v380
    %v391 = vsel %vm384, %v387, %v390
    %v392 = vsel %vm381, nan, %v391
    %v393 = vand.u32 2147483647, %v80
    %vm394 = vcmp.le.f32.partialorder %v393, 0.7853982
    %vm395 = vcmp.lt.s32.totalorder %v80, 0
    %v396 = vand.u32 %v80, 2139095040
    %v397 = vshrl.u32 %v396, 23
    %v398 = vsub.s32 %v397, 127
    %v399 = vand.u32 2147483647, %v80
    %v400 = vand.u32 %v399, 8388607
    %v401 = vor.u32 %v400, 8388608
    %v402 = vsub.s32 0, %v401
    %v403 = vadd.s32 %v398, 1
    %vm404 = vcmp.gt.s32.totalorder %v403, 0
    %v405 = vsel %vm404, %v403, 0
    %v406 = vshrl.u32 %v405, 5
    %v407 = vand.u32 %v405, 31
    %v408 = vsub.s32 32, %v407
    %v409 = vshrl.u32 683565275, %v408
    %v410 = vshll.u32 683565275, %v407
    %v411 = vshrl.u32 2475754826, %v408
    %v412 = vor.u32 %v410, %v411
    %v413 = vshll.u32 2475754826, %v407
    %v414 = vshrl.u32 2131351028, %v408
    %v415 = vor.u32 %v413, %v414
    %v416 = vshll.u32 2131351028, %v407
    %v417 = vshrl.u32 2102212464, %v408
    %v418 = vor.u32 %v416, %v417
    %v419 = vshll.u32 2102212464, %v407
    %v420 = vshrl.u32 920167782, %v408
    %v421 = vor.u32 %v419, %v420
    %v422 = vshll.u32 920167782, %v407
    %v423 = vshrl.u32 1326507024, %v408
    %v424 = vor.u32 %v422, %v423
    %vm425 = vcmp.lt.s32.totalorder %v406, 1
    %vm426 = vcmp.lt.s32.totalorder %v406, 2
    %vm427 = vcmp.lt.s32.totalorder %v406, 3
    %vm428 = vcmp.lt.s32.totalorder %v406, 4
    %v429 = vsel %vm425, %v409, %v412
    %v430 = vsel %vm428, %v418, 2102212464
    %v431 = vsel %vm427, %v415, %v430
    %v432 = vsel %vm426, %v429, %v431
    %v433 = vsel %vm425, %v412, %v415
    %v434 = vsel %vm428, %v421, 920167782
    %v435 = vsel %vm427, %v418, %v434
    %v436 = vsel %vm426, %v433, %v435
    %v437 = vsel %vm425, %v415, %v418
    %v438 = vsel %vm428, %v424, 1326507024
    %v439 = vsel %vm427, %v421, %v438
    %v440 = vsel %vm426, %v437, %v439
    %v441 = vshll.u32 %v401, 8
    %v442 = vmul.u32.u64.compose %v441, %v440
    %v443 = vextract.low.u32 %v442
    %v444 = vextract.high.u32 %v442
    %v445 = vmul.u32.u64.compose %v441, %v436
    %v446 = vextract.low.u32 %v445
    %v447 = vextract.high.u32 %v445
    %v448 = vmul.u32 %v441, %v432
    %v449 = vadd.s32 %v444, %v446
    %vm450 = vc.u32 %v444, %v446
    %v451 = vadd.s32 %v447, 1
    %v452 = vsel %vm450, %v451, %v447
    %v453 = vadd.s32 %v448, %v452
    %v454 = vadd.s32 %v453, 536870912
    %v455 = vshrl.u32 %v454, 30
    %v456 = vshll.u32 %v455, 30
    %v457 = vsub.s32 %v453, %v456
    %vm458 = vcmp.lt.s32.totalorder %v457, 0
    %v459 = vsub.s32 0, %v457
    %v460 = vsel %vm458, %v459, %v457
    %v461 = vclz %v460
    %v462 = vsub.s32 %v461, 2
    %vm463 = vcmp.gt.s32.totalorder 0, %v462
    %v464 = vsel %vm463, 0, %v462
    %v465 = vsub.s32 32, %v464
    %v466 = vshll.u32 %v457, %v464
    %v467 = vshrl.u32 %v449, %v465
    %v468 = vor.u32 %v466, %v467
    %v469 = vsub.s32 4294967266, %v464
    %v470 = vadd.s32 %v469, 127
    %v471 = vshll.u32 %v470, 23
    %v472 = vor.u32 4788187, %v471
    %v473 = vand.u32 2147483647, %v472
    %v475 = vcvt.s32.f32 %v468
    %v476 = vmul.f32 %v475, %v473
    %v477 = vxor.u32 %v476, 2147483648
    %v478 = vsel %vm395, %v477, %v476
    %v479 = vsub.s32 4, %v455
    %v480 = vsel %vm395, %v479, %v455
    %v481 = vsel %vm394, %v80, %v478
    %v482 = vsel %vm394, 0, %v480
    %v483 = vcosq.f32.pop %v481
    %v484 = vsinq.f32.pop %v481
    %vm485 = vweird.f32 %v80
    %v486 = vadd.s32 %v482, 3
    %v487 = vand.u32 %v486, 3
    %vm488 = vcmp.lt.s32.totalorder %v487, 2
    %vm489 = vcmp.eq.s32.totalorder %v487, 0
    %v490 = vxor.u32 %v484, 2147483648
    %v491 = vsel %vm489, %v483, %v490
    %vm492 = vcmp.eq.s32.totalorder %v487, 2
    %v493 = vxor.u32 %v483, 2147483648
    %v494 = vsel %vm492, %v493, %v484
    %v495 = vsel %vm488, %v491, %v494
    %v496 = vsel %vm485, nan, %v495
    %v501 = vcombine.low %v184, %v288
    %v502 = vcombine.low %v392, %v496
    %v504 = vunpack.c.l.s4 1966171168
    %v505 = vunpack.c.0.s8 %v504
    %v506 = vlaneseq
    %v507 = vshrl.u32 %v506, 7
    %v508 = vsub.s32 %v505, %v507
    %v509 = vrot.slane %v501, %v508
    %v511 = vunpack.c.l.s4 1966171168
    %v512 = vunpack.c.0.s8 %v511
    %v513 = vlaneseq
    %v514 = vshrl.u32 %v513, 7
    %v515 = vsub.s32 %v512, %v514
    %v516 = vrot.slane %v502, %v515
    %v517 = vcombine.low %v509, %v516
    %v519 = vunpack.c.l.s4 1966171168
    %v520 = vunpack.c.0.s8 %v519
    %v521 = vlaneseq
    %v522 = vshrl.u32 %v521, 7
    %v523 = vsub.s32 %v520, %v522
    %v524 = vrot.slane %v517, %v523
    %v526 = vlaneseq
    %vm527 = vcmp.ge.s32.totalorder %v526, 0
    %vm528 = vcmp.lt.s32.totalorder %v526, 512
    %vm529 = vmand %vm527, %vm528
    %530 = vst.msk [vmem:[#allocation5] sm:$0xf] %vm529, %v524
    // Predicated region
    $region10: #{tpu_custom_call.1} parent=1 // pred_check
      _
    $region11: #{tpu_custom_call.1} parent=1 // pred_check_branch
      %532 = sbr.rel (0) target = $region13
    $region12: #{tpu_custom_call.1} parent=1 // pred_region
      %s534 = ssub.s32 64, 64
      %535 = vsyncadd [#allocation4], %s534
      %s537 = sshll.u32 [#allocation5], 4
      %s538 = int_to_ptr.vmem [resolvable:$true] %s537
      %540 = dma.vmem_to_hbm [thread:$0]  %s538, 64, %s1, [#allocation4]
    $region13: #{tpu_custom_call.1} parent=1 // pred_fallthru
      _
    // Predicated region
    $region14: #{tpu_custom_call.1} parent=1 // pred_check
      _
    $region15: #{tpu_custom_call.1} parent=1 // pred_check_branch
      %542 = sbr.rel (0) target = $region17
    $region16: #{tpu_custom_call.1} parent=1 // pred_region
      %543 = dma.done [#allocation4], 64
    $region17: #{tpu_custom_call.1} parent=1 // pred_fallthru
      _
    %544 = vsyncpa [#allocation3], 1
    %545 = vsyncpa [#allocation4], 1

</llo_original>
